<compile_context>
chip_gen: v7x
topology: tpu7x:2x2x1
jax: 0.10.0
libtpu: 0.0.40
codegen_flags: <defaults>
</compile_context>

<pallas_src>
import functools
import math

import jax
import jax.numpy as jnp
from jax.experimental import pallas as pl
from jax.experimental.pallas import tpu as pltpu


def _cv_squared(v):
    # torch: x.float().var() / (x.float().mean()**2 + eps); var is unbiased (ddof=1)
    eps = 1e-10
    v = v.astype(jnp.float32)
    n = v.shape[0]
    if n == 1:
        return jnp.float32(0.0)
    mean = jnp.mean(v)
    var = jnp.sum((v - mean) ** 2) / (n - 1)
    return var / (mean * mean + eps)


def _noisy_gate_v2_kernel(x_ref, wt_ref, gates_ref, part_ref, *, n_valid):
    i = pl.program_id(0)
    tn, _ = x_ref.shape
    E, _ = wt_ref.shape

    # clean_logits^T : [E, tn] — tokens on the lane axis (lane-dense for small E).
    # No upcast of the operands; the MXU accumulates in f32.
    logits = jax.lax.dot_general(
        wt_ref[...], x_ref[...],
        dimension_numbers=(((1,), (1,)), ((), ())),
        preferred_element_type=jnp.float32)

    # Validity mask for the zero-padded tail of the last token tile.
    lane = jax.lax.broadcasted_iota(jnp.int32, (1, tn), 1)
    valid = (i * tn + lane) < n_valid                                 # [1, tn]

    # softmax over experts (axis 0); divide via the approximate EUP reciprocal.
    m = jnp.max(logits, axis=0, keepdims=True)
    e = jnp.exp(logits - m)
    denom = jnp.sum(e, axis=0, keepdims=True)
    sm = e * pl.reciprocal(denom, approx=True)                        # [E, tn]

    # top-2 per token (lowest index wins ties, like torch.topk).
    rows = jax.lax.broadcasted_iota(jnp.int32, (E, tn), 0)
    v1 = jnp.max(sm, axis=0, keepdims=True)
    idx1 = jnp.min(jnp.where(sm == v1, rows, E), axis=0, keepdims=True)
    mask1 = rows == idx1
    sm_m = jnp.where(mask1, -jnp.inf, sm)
    v2 = jnp.max(sm_m, axis=0, keepdims=True)
    idx2 = jnp.min(jnp.where(sm_m == v2, rows, E), axis=0, keepdims=True)
    mask2 = rows == idx2
    topk = mask1 | mask2

    # gates (transposed) = zeros.scatter(1, top_k_indices, top_k_softmax)
    gates_ref[...] = jnp.where(topk & valid, sm, 0.0).astype(gates_ref.dtype)

    # Per-tile partial reductions (finalized in the JAX wrapper):
    #   column 0 -> importance partial, column 1 -> load partial,
    #   element [0, 2] -> shift count partial.
    imp = jnp.sum(jnp.where(valid, sm, 0.0), axis=1, keepdims=True)           # [E, 1]
    load = jnp.sum(jnp.where(topk & valid, 1.0, 0.0), axis=1, keepdims=True)  # [E, 1]
    shift = jnp.sum(jnp.where(valid,
                              (idx1 != 0).astype(jnp.float32)
                              + (idx2 != 0).astype(jnp.float32),
                              0.0))                                           # scalar

    col8 = jax.lax.broadcasted_iota(jnp.int32, (E, 8), 1)
    row8 = jax.lax.broadcasted_iota(jnp.int32, (E, 8), 0)
    part = jnp.where(col8 == 0, imp, jnp.where(col8 == 1, load, 0.0))
    part = jnp.where((col8 == 2) & (row8 == 0), shift, part)
    part_ref[0] = part


def noisy_gate_v2(x, w_gate, *, tn=256):
    """Eval-mode NoisyGate_V2 forward.

    Returns (gates [N,E], importance [E], load [E], loss scalar, shift_ratio scalar).
    gates are returned in x.dtype (== float32 for f32 activations, matching torch).
    """
    N, D = x.shape
    Dw, E = w_gate.shape
    assert D == Dw
    assert tn % 128 == 0, "token tile must be a multiple of 128 lanes"

    n_tiles = pl.cdiv(N, tn)
    n_pad = n_tiles * tn
    if n_pad != N:
        # Pad tokens to a full tile; padded rows are masked inside the kernel.
        x = jnp.pad(x, ((0, n_pad - N), (0, 0)))
    w_t = jnp.transpose(w_gate)  # [E, D]; one-time O(D*E) transpose outside the kernel

    kernel = functools.partial(_noisy_gate_v2_kernel, n_valid=N)

    gates_t, partials = pl.pallas_call(
        kernel,
        out_shape=(
            jax.ShapeDtypeStruct((E, n_pad), x.dtype),          # gates (transposed)
            jax.ShapeDtypeStruct((n_tiles, E, 8), jnp.float32),  # per-tile partials
        ),
        grid=(n_tiles,),
        in_specs=[
            pl.BlockSpec((tn, D), lambda i: (i, 0)),   # streamed token tile
            pl.BlockSpec((E, D), lambda i: (0, 0)),    # resident w_gate^T
        ],
        out_specs=(
            pl.BlockSpec((E, tn), lambda i: (0, i)),
            pl.BlockSpec((1, E, 8), lambda i: (i, 0, 0)),
        ),
        compiler_params=pltpu.CompilerParams(
            dimension_semantics=("parallel",)),
    )(x, w_t)

    # ---- tiny O(E) epilogue in plain JAX over the per-tile partials ----
    gates = gates_t[:, :N].T                                   # [N, E]
    importance = partials[:, :, 0].sum(axis=0)                 # [E]
    load = partials[:, :, 1].sum(axis=0)                       # [E]
    shift_count = partials[:, 0, 2].sum()

    eid = jnp.arange(E)
    scale = jnp.where(eid == 0, 6.0, jnp.where(eid == 1, 4.0, 1.0)).astype(jnp.float32)
    importance = importance * scale                            # [0]*=6, [1]*=4

    loss = _cv_squared(importance) + _cv_squared(load)
    shift_ratio = shift_count / N
    return gates, importance, load, loss, shift_ratio


def _reference(x, w_gate):
    """Pure-JAX eval-mode reference (exact softmax division)."""
    logits = x.astype(jnp.float32) @ w_gate.astype(jnp.float32)
    sm = jax.nn.softmax(logits, axis=1)
    N, E = sm.shape
    col = jnp.arange(E)[None, :]
    v1 = sm.max(axis=1, keepdims=True)
    idx1 = jnp.where(sm == v1, col, E).min(axis=1, keepdims=True)
    mask1 = col == idx1
    sm_m = jnp.where(mask1, -jnp.inf, sm)
    v2 = sm_m.max(axis=1, keepdims=True)
    idx2 = jnp.where(sm_m == v2, col, E).min(axis=1, keepdims=True)
    mask2 = col == idx2
    gates = jnp.where(mask1 | mask2, sm, 0.0)
    load = (gates > 0).sum(axis=0).astype(jnp.float32)
    imp = sm.sum(axis=0)
    scale = jnp.where(jnp.arange(E) == 0, 6.0,
                      jnp.where(jnp.arange(E) == 1, 4.0, 1.0))
    imp = imp * scale
    loss = _cv_squared(imp) + _cv_squared(load)
    shift = (jnp.sum(idx1 != 0) + jnp.sum(idx2 != 0)) / N
    return gates, imp, load, loss, shift


if __name__ == "__main__":
    # Module config: d_model=32, num_expert=4, world_size=1, top_k=2.
    d_model, num_expert, world_size, top_k = 32, 4, 1, 2
    tot_expert = num_expert * world_size
    N = 200  # not a multiple of the token tile -> exercises padding + multi-tile

    key = jax.random.PRNGKey(0)
    kx, kw = jax.random.split(key)
    x = jax.random.normal(kx, (N, d_model), dtype=jnp.float32)

    # kaiming_uniform_(a=sqrt(5)) on w_gate [d_model, tot_expert]:
    # fan_in = tot_expert (torch 2-D fan_in = size(1)),
    # gain = sqrt(2/(1+5)), bound = gain * sqrt(3/fan_in)
    fan_in = tot_expert
    bound = math.sqrt(2.0 / (1.0 + 5.0)) * math.sqrt(3.0 / fan_in)
    w_gate = jax.random.uniform(kw, (d_model, tot_expert), dtype=jnp.float32,
                                minval=-bound, maxval=bound)

    gates, importance, load, loss, shift_ratio = jax.block_until_ready(
        noisy_gate_v2(x, w_gate, tn=128))

    # structural sanity: exactly top_k nonzero gates per token
    assert gates.shape == (N, tot_expert)
    assert int((gates > 0).sum()) == N * top_k
    assert int(load.sum()) == N * top_k

    # numeric check vs pure-JAX reference (loose tolerance: the kernel uses the
    # approximate EUP reciprocal for the softmax denominator)
    r_gates, r_imp, r_load, r_loss, r_shift = _reference(x, w_gate)
    assert jnp.allclose(gates, r_gates, rtol=5e-2, atol=1e-2)
    assert jnp.allclose(importance, r_imp, rtol=5e-2, atol=1e-2)
    assert jnp.allclose(load, r_load)
    assert jnp.allclose(loss, r_loss, rtol=1e-1, atol=1e-2)
    assert jnp.allclose(shift_ratio, r_shift)

    print("KERNEL_OK")
</pallas_src>

<mosaic_0001>
module attributes {stable_mosaic.version = 11 : i64} {
  func.func @_noisy_gate_v2_kernel(%arg0: i32, %arg1: memref<128x32xf32, #tpu.memory_space<vmem>>, %arg2: memref<4x32xf32, #tpu.memory_space<vmem>>, %arg3: memref<4x128xf32, #tpu.memory_space<vmem>>, %arg4: memref<1x4x8xf32, #tpu.memory_space<vmem>>) attributes {dimension_semantics = [#tpu.dimension_semantics<parallel>], iteration_bounds = array<i64: 2>, scalar_prefetch = 0 : i64, scratch_operands = 0 : i64, tpu.core_type = #tpu.core_type<tc>, window_params = [{transform_indices = @transform_0, window_bounds = array<i64: 128, 32>}, {pipeline_mode = #tpu.pipeline_mode<synchronous>, transform_indices = @transform_1, window_bounds = array<i64: 4, 32>}, {transform_indices = @transform_2, window_bounds = array<i64: 4, 128>}, {transform_indices = @transform_3, window_bounds = array<i64: 1, 4, 8>}]} {
    %c0 = arith.constant 0 : index
    %c0_0 = arith.constant 0 : index
    %0 = vector.load %arg2[%c0, %c0_0] : memref<4x32xf32, #tpu.memory_space<vmem>>, vector<4x32xf32>
    %c0_1 = arith.constant 0 : index
    %c0_2 = arith.constant 0 : index
    %1 = vector.load %arg1[%c0_1, %c0_2] : memref<128x32xf32, #tpu.memory_space<vmem>>, vector<128x32xf32>
    %cst = arith.constant dense<0.000000e+00> : vector<4x128xf32>
    %2 = tpu.matmul %0, %1, %cst {dimension_numbers = #tpu.dot_dimension_numbers<[1], [1], [0], [0], [0, 0, 1, 0], [], []>} : vector<4x32xf32>, vector<128x32xf32>, vector<4x128xf32> -> vector<4x128xf32>
    %3 = tpu.iota {dimensions = array<i32: 1>} : vector<1x128xi32>
    %c128_i32 = arith.constant 128 : i32
    %4 = arith.muli %arg0, %c128_i32 : i32
    %5 = vector.broadcast %4 : i32 to vector<1x128xi32>
    %6 = arith.addi %5, %3 : vector<1x128xi32>
    %c200_i32 = arith.constant 200 : i32
    %7 = vector.broadcast %c200_i32 : i32 to vector<1x128xi32>
    %8 = arith.cmpi slt, %6, %7 : vector<1x128xi32>
    %cst_3 = arith.constant dense<0xFF800000> : vector<128xf32>
    %9 = vector.multi_reduction <maximumf>, %2, %cst_3 [0] : vector<4x128xf32> to vector<128xf32>
    %10 = vector.shape_cast %9 : vector<128xf32> to vector<1x128xf32>
    %11 = vector.broadcast %10 : vector<1x128xf32> to vector<4x128xf32>
    %12 = arith.subf %2, %11 : vector<4x128xf32>
    %13 = math.exp %12 : vector<4x128xf32>
    %cst_4 = arith.constant dense<0.000000e+00> : vector<128xf32>
    %14 = vector.multi_reduction <add>, %13, %cst_4 [0] : vector<4x128xf32> to vector<128xf32>
    %15 = vector.shape_cast %14 : vector<128xf32> to vector<1x128xf32>
    %16 = tpu.reciprocal %15 {approx = true} : vector<1x128xf32> -> vector<1x128xf32>
    %17 = vector.broadcast %16 : vector<1x128xf32> to vector<4x128xf32>
    %18 = arith.mulf %13, %17 : vector<4x128xf32>
    %19 = tpu.iota {dimensions = array<i32: 0>} : vector<4x128xi32>
    %cst_5 = arith.constant dense<0xFF800000> : vector<128xf32>
    %20 = vector.multi_reduction <maximumf>, %18, %cst_5 [0] : vector<4x128xf32> to vector<128xf32>
    %21 = vector.shape_cast %20 : vector<128xf32> to vector<1x128xf32>
    %22 = vector.broadcast %21 : vector<1x128xf32> to vector<4x128xf32>
    %23 = arith.cmpf oeq, %18, %22 : vector<4x128xf32>
    %c4_i32 = arith.constant 4 : i32
    %24 = vector.broadcast %c4_i32 : i32 to vector<4x128xi32>
    %25 = arith.select %23, %19, %24 : vector<4x128xi1>, vector<4x128xi32>
    %cst_6 = arith.constant dense<2147483647> : vector<128xi32>
    %26 = vector.multi_reduction <minsi>, %25, %cst_6 [0] : vector<4x128xi32> to vector<128xi32>
    %27 = vector.shape_cast %26 : vector<128xi32> to vector<1x128xi32>
    %28 = vector.broadcast %27 : vector<1x128xi32> to vector<4x128xi32>
    %29 = arith.cmpi eq, %19, %28 : vector<4x128xi32>
    %cst_7 = arith.constant 0xFF800000 : f32
    %30 = vector.broadcast %cst_7 : f32 to vector<4x128xf32>
    %31 = arith.select %29, %30, %18 : vector<4x128xi1>, vector<4x128xf32>
    %cst_8 = arith.constant dense<0xFF800000> : vector<128xf32>
    %32 = vector.multi_reduction <maximumf>, %31, %cst_8 [0] : vector<4x128xf32> to vector<128xf32>
    %33 = vector.shape_cast %32 : vector<128xf32> to vector<1x128xf32>
    %34 = vector.broadcast %33 : vector<1x128xf32> to vector<4x128xf32>
    %35 = arith.cmpf oeq, %31, %34 : vector<4x128xf32>
    %c4_i32_9 = arith.constant 4 : i32
    %36 = vector.broadcast %c4_i32_9 : i32 to vector<4x128xi32>
    %37 = arith.select %35, %19, %36 : vector<4x128xi1>, vector<4x128xi32>
    %cst_10 = arith.constant dense<2147483647> : vector<128xi32>
    %38 = vector.multi_reduction <minsi>, %37, %cst_10 [0] : vector<4x128xi32> to vector<128xi32>
    %39 = vector.shape_cast %38 : vector<128xi32> to vector<1x128xi32>
    %40 = vector.broadcast %39 : vector<1x128xi32> to vector<4x128xi32>
    %41 = arith.cmpi eq, %19, %40 : vector<4x128xi32>
    %42 = arith.ori %29, %41 : vector<4x128xi1>
    %43 = vector.broadcast %8 : vector<1x128xi1> to vector<4x128xi1>
    %44 = arith.andi %42, %43 : vector<4x128xi1>
    %cst_11 = arith.constant 0.000000e+00 : f32
    %45 = vector.broadcast %cst_11 : f32 to vector<4x128xf32>
    %46 = arith.select %44, %18, %45 : vector<4x128xi1>, vector<4x128xf32>
    %c0_12 = arith.constant 0 : index
    %c0_13 = arith.constant 0 : index
    %47 = vector.load %arg3[%c0_12, %c0_13] : memref<4x128xf32, #tpu.memory_space<vmem>>, vector<4x128xf32>
    tpu.vector_store %arg3[%c0_12, %c0_13], %46 {strides = array<i32>} : memref<4x128xf32, #tpu.memory_space<vmem>>, vector<4x128xf32>,
    %cst_14 = arith.constant 0.000000e+00 : f32
    %48 = vector.shape_cast %8 : vector<1x128xi1> to vector<1x128xi1>
    %49 = vector.broadcast %48 : vector<1x128xi1> to vector<4x128xi1>
    %50 = vector.broadcast %cst_14 : f32 to vector<4x128xf32>
    %51 = arith.select %49, %18, %50 : vector<4x128xi1>, vector<4x128xf32>
    %cst_15 = arith.constant dense<0.000000e+00> : vector<4xf32>
    %52 = vector.multi_reduction <add>, %51, %cst_15 [1] : vector<4x128xf32> to vector<4xf32>
    %53 = vector.shape_cast %52 : vector<4xf32> to vector<4x1xf32>
    %54 = vector.broadcast %8 : vector<1x128xi1> to vector<4x128xi1>
    %55 = arith.andi %42, %54 : vector<4x128xi1>
    %cst_16 = arith.constant 1.000000e+00 : f32
    %cst_17 = arith.constant 0.000000e+00 : f32
    %56 = vector.broadcast %cst_16 : f32 to vector<4x128xf32>
    %57 = vector.broadcast %cst_17 : f32 to vector<4x128xf32>
    %58 = arith.select %55, %56, %57 : vector<4x128xi1>, vector<4x128xf32>
    %cst_18 = arith.constant dense<0.000000e+00> : vector<4xf32>
    %59 = vector.multi_reduction <add>, %58, %cst_18 [1] : vector<4x128xf32> to vector<4xf32>
    %60 = vector.shape_cast %59 : vector<4xf32> to vector<4x1xf32>
    %c0_i32 = arith.constant 0 : i32
    %61 = vector.broadcast %c0_i32 : i32 to vector<1x128xi32>
    %62 = arith.cmpi ne, %27, %61 : vector<1x128xi32>
    %63 = arith.extui %62 : vector<1x128xi1> to vector<1x128xi32>
    %64 = arith.sitofp %63 : vector<1x128xi32> to vector<1x128xf32>
    %c0_i32_19 = arith.constant 0 : i32
    %65 = vector.broadcast %c0_i32_19 : i32 to vector<1x128xi32>
    %66 = arith.cmpi ne, %39, %65 : vector<1x128xi32>
    %67 = arith.extui %66 : vector<1x128xi1> to vector<1x128xi32>
    %68 = arith.sitofp %67 : vector<1x128xi32> to vector<1x128xf32>
    %69 = arith.addf %64, %68 : vector<1x128xf32>
    %cst_20 = arith.constant 0.000000e+00 : f32
    %70 = vector.broadcast %cst_20 : f32 to vector<1x128xf32>
    %71 = arith.select %8, %69, %70 : vector<1x128xi1>, vector<1x128xf32>
    %72 = vector.shape_cast %71 : vector<1x128xf32> to vector<1x1x128xf32>
    %cst_21 = arith.constant dense<0.000000e+00> : vector<1xf32>
    %73 = vector.multi_reduction <add>, %72, %cst_21 [1, 2] : vector<1x1x128xf32> to vector<1xf32>
    %74 = vector.shape_cast %73 : vector<1xf32> to vector<1x1x1xf32>
    %75 = vector.extract %74[0, 0, 0] : f32 from vector<1x1x1xf32>
    %76 = tpu.iota {dimensions = array<i32: 1>} : vector<4x8xi32>
    %77 = tpu.iota {dimensions = array<i32: 0>} : vector<4x8xi32>
    %c0_i32_22 = arith.constant 0 : i32
    %78 = vector.broadcast %c0_i32_22 : i32 to vector<4x8xi32>
    %79 = arith.cmpi eq, %76, %78 : vector<4x8xi32>
    %c1_i32 = arith.constant 1 : i32
    %80 = vector.broadcast %c1_i32 : i32 to vector<4x8xi32>
    %81 = arith.cmpi eq, %76, %80 : vector<4x8xi32>
    %cst_23 = arith.constant 0.000000e+00 : f32
    %82 = vector.shape_cast %60 : vector<4x1xf32> to vector<4x1xf32>
    %83 = vector.broadcast %82 : vector<4x1xf32> to vector<4x8xf32>
    %84 = vector.broadcast %cst_23 : f32 to vector<4x8xf32>
    %85 = arith.select %81, %83, %84 : vector<4x8xi1>, vector<4x8xf32>
    %86 = vector.shape_cast %53 : vector<4x1xf32> to vector<4x1xf32>
    %87 = vector.broadcast %86 : vector<4x1xf32> to vector<4x8xf32>
    %88 = arith.select %79, %87, %85 : vector<4x8xi1>, vector<4x8xf32>
    %c2_i32 = arith.constant 2 : i32
    %89 = vector.broadcast %c2_i32 : i32 to vector<4x8xi32>
    %90 = arith.cmpi eq, %76, %89 : vector<4x8xi32>
    %c0_i32_24 = arith.constant 0 : i32
    %91 = vector.broadcast %c0_i32_24 : i32 to vector<4x8xi32>
    %92 = arith.cmpi eq, %77, %91 : vector<4x8xi32>
    %93 = arith.andi %90, %92 : vector<4x8xi1>
    %94 = vector.broadcast %75 : f32 to vector<4x8xf32>
    %95 = arith.select %93, %94, %88 : vector<4x8xi1>, vector<4x8xf32>
    %c0_25 = arith.constant 0 : index
    %c0_26 = arith.constant 0 : index
    %c0_27 = arith.constant 0 : index
    %96 = vector.load %arg4[%c0_25, %c0_26, %c0_27] : memref<1x4x8xf32, #tpu.memory_space<vmem>>, vector<1x4x8xf32>
    %97 = vector.shape_cast %96 : vector<1x4x8xf32> to vector<4x8xf32>
    %98 = vector.shape_cast %95 : vector<4x8xf32> to vector<1x4x8xf32>
    tpu.vector_store %arg4[%c0_25, %c0_26, %c0_27], %98 {strides = array<i32>} : memref<1x4x8xf32, #tpu.memory_space<vmem>>, vector<1x4x8xf32>,
    return
  }
  func.func @transform_0(%arg0: i32) -> (i32, i32) {
    %c0_i32 = arith.constant 0 : i32
    %c0_i32_0 = arith.constant 0 : i32
    return %arg0, %c0_i32 : i32, i32
  }
  func.func @transform_1(%arg0: i32) -> (i32, i32) {
    %c0_i32 = arith.constant 0 : i32
    %c0_i32_0 = arith.constant 0 : i32
    %c0_i32_1 = arith.constant 0 : i32
    return %c0_i32, %c0_i32_0 : i32, i32
  }
  func.func @transform_2(%arg0: i32) -> (i32, i32) {
    %c0_i32 = arith.constant 0 : i32
    %c0_i32_0 = arith.constant 0 : i32
    return %c0_i32, %arg0 : i32, i32
  }
  func.func @transform_3(%arg0: i32) -> (i32, i32, i32) {
    %c0_i32 = arith.constant 0 : i32
    %c0_i32_0 = arith.constant 0 : i32
    %c0_i32_1 = arith.constant 0 : i32
    return %arg0, %c0_i32, %c0_i32_0 : i32, i32, i32
  }
}

</mosaic_0001>

<llo_original>
// kernel: tpu_custom_call.1
$region0: #{tpu_custom_call.1}
  #allocation0 [shape = 'u32[]', space=smem, size = 0x4, offset = 0x4, fixed_abs, tag = 'smem constant byte address 0x4 - core index']
  #allocation1 [shape = 'u32[144,128]{1,0:T(1,128)}', space=vmem, size = 0x12000, scoped, tag = 'internal scratch']
  %s0 = inlined_call_operand.vmem [shape: f32[256,32], index: 0, kind: input, shape index: {}]
  %s1 = inlined_call_operand.vmem [shape: f32[4,32], index: 1, kind: input, shape index: {}]
  %s2 = inlined_call_operand.hbm [shape: f32[4,256], index: 2, kind: output, shape index: {0}]
  %s3 = inlined_call_operand.hbm [shape: f32[2,4,8], index: 3, kind: output, shape index: {1}]
  %4 = xla_tuple %s2, %s3
  %s5 = sld [smem:[#allocation0]]
  $region49: #{tpu_custom_call.1} parent=0
    _
  %s7 = ssub.s32 1, %s5
  %s8 = scalar_select 0, %s7, %s5
  $region1: #{tpu_custom_call.1} parent=0
    #allocation2 [shape = 'u8[4096]{0}', space=vmem, size = 0x1000, scoped, tag = 'output window, operand 0']
    #allocation3 [shape = 's32[2]{0}', space=sflag, size = 0x8, scoped, tag = 'scoped memory for tpu_custom_call.1']
    #allocation4 [shape = 'u8[4096]{0}', space=vmem, size = 0x1000, scoped, tag = 'output window, operand 1']
    #allocation5 [shape = 's32[2]{0}', space=sflag, size = 0x8, scoped, tag = 'scoped memory for tpu_custom_call.1']
    %9 = vsyncpa [#allocation3], 0
    %s10 = scalar_lea.sflag [#allocation3], 1
    %11 = vsyncpa %s10, 0
    %12 = vsyncpa [#allocation5], 0
    %s13 = scalar_lea.sflag [#allocation5], 1
    %14 = vsyncpa %s13, 0
    loop: start=0, step=1, limit=4
    $region2: #{tpu_custom_call.1} parent=1 // loop_pre_header
      _
    $region3: #{tpu_custom_call.1} parent=1 // loop_header
      %s16 = sphi 0, %s20
      %p17 = scmp.ge.s32.totalorder %s16, 4
      %s26 = sphi 0, %s28
      %s29 = sphi 0, %s26
      %s30 = sphi 0, %s29
      %s46 = sphi 0, %s30
      %s50 = sphi 0, %s50
      %s52 = sphi 0, %s50
      %s53 = sphi 0, %s52
      %s67 = sphi 0, %s53
      %s73 = sphi 0, %s75
      %s76 = sphi 0, %s73
      %s77 = sphi 0, %s76
      %s93 = sphi 0, %s77
      %s99 = sphi 0, %s101
      %s102 = sphi 0, %s99
      %s103 = sphi 0, %s102
      %s119 = sphi 0, %s103
    $region4: #{tpu_custom_call.1} parent=1 // loop_header_branch
      %19 = sbr.rel (%p17) target = $region8
    $region5: #{tpu_custom_call.1} parent=1 // loop_body
      %s21 = ssub.s32 %s16, 1
      %s22 = ssub.s32 %s16, 2
      %s23 = sadd.s32 %s16, 1
      %s24 = ssub.s32 %s16, %s23
      %p25 = scmp.eq.s32.totalorder %s24, 0
      %s27 = sadd.s32 %s26, 1
      %s28 = scalar_select %p25, %s26, %s27
      %p31 = pneg %p25
      %p32 = scmp.eq.s32.totalorder %s16, 1
      %p33 = por %p31, %p32
      %p34 = scmp.ne.s32.totalorder %s26, %s29
      %p35 = scmp.eq.s32.totalorder %s16, 0
      %p36 = por %p34, %p35
      %p37 = scmp.ne.s32.totalorder %s26, %s29
      %p38 = scmp.eq.s32.totalorder %s21, 1
      %p39 = por %p37, %p38
      %p40 = scmp.ne.s32.totalorder %s29, %s30
      %p41 = scmp.eq.s32.totalorder %s21, 0
      %p42 = por %p40, %p41
      %p43 = scmp.ne.s32.totalorder %s29, %s30
      %p44 = scmp.eq.s32.totalorder %s22, 1
      %p45 = por %p43, %p44
      %p47 = scmp.ne.s32.totalorder %s30, %s46
      %p48 = scmp.eq.s32.totalorder %s22, 0
      %p49 = por %p47, %p48
      %s51 = sadd.s32 %s50, 1
      %p54 = scmp.eq.s32.totalorder %s16, 1
      %p55 = scmp.ne.s32.totalorder %s50, %s52
      %p56 = scmp.eq.s32.totalorder %s16, 0
      %p57 = por %p55, %p56
      %p58 = scmp.ne.s32.totalorder %s50, %s52
      %p59 = scmp.eq.s32.totalorder %s21, 1
      %p60 = por %p58, %p59
      %p61 = scmp.ne.s32.totalorder %s52, %s53
      %p62 = scmp.eq.s32.totalorder %s21, 0
      %p63 = por %p61, %p62
      %p64 = scmp.ne.s32.totalorder %s52, %s53
      %p65 = scmp.eq.s32.totalorder %s22, 1
      %p66 = por %p64, %p65
      %p68 = scmp.ne.s32.totalorder %s53, %s67
      %p69 = scmp.eq.s32.totalorder %s22, 0
      %p70 = por %p68, %p69
      %s71 = ssub.s32 %s16, %s23
      %p72 = scmp.eq.s32.totalorder %s71, 0
      %s74 = sadd.s32 %s73, 1
      %s75 = scalar_select %p72, %s73, %s74
      %p78 = pneg %p72
      %p79 = scmp.eq.s32.totalorder %s16, 1
      %p80 = por %p78, %p79
      %p81 = scmp.ne.s32.totalorder %s73, %s76
      %p82 = scmp.eq.s32.totalorder %s16, 0
      %p83 = por %p81, %p82
      %p84 = scmp.ne.s32.totalorder %s73, %s76
      %p85 = scmp.eq.s32.totalorder %s21, 1
      %p86 = por %p84, %p85
      %p87 = scmp.ne.s32.totalorder %s76, %s77
      %p88 = scmp.eq.s32.totalorder %s21, 0
      %p89 = por %p87, %p88
      %p90 = scmp.ne.s32.totalorder %s76, %s77
      %p91 = scmp.eq.s32.totalorder %s22, 1
      %p92 = por %p90, %p91
      %p94 = scmp.ne.s32.totalorder %s77, %s93
      %p95 = scmp.eq.s32.totalorder %s22, 0
      %p96 = por %p94, %p95
      %s97 = ssub.s32 %s16, %s23
      %p98 = scmp.eq.s32.totalorder %s97, 0
      %s100 = sadd.s32 %s99, 1
      %s101 = scalar_select %p98, %s99, %s100
      %p104 = pneg %p98
      %p105 = scmp.eq.s32.totalorder %s16, 1
      %p106 = por %p104, %p105
      %p107 = scmp.ne.s32.totalorder %s99, %s102
      %p108 = scmp.eq.s32.totalorder %s16, 0
      %p109 = por %p107, %p108
      %p110 = scmp.ne.s32.totalorder %s99, %s102
      %p111 = scmp.eq.s32.totalorder %s21, 1
      %p112 = por %p110, %p111
      %p113 = scmp.ne.s32.totalorder %s102, %s103
      %p114 = scmp.eq.s32.totalorder %s21, 0
      %p115 = por %p113, %p114
      %p116 = scmp.ne.s32.totalorder %s102, %s103
      %p117 = scmp.eq.s32.totalorder %s22, 1
      %p118 = por %p116, %p117
      %p120 = scmp.ne.s32.totalorder %s103, %s119
      %p121 = scmp.eq.s32.totalorder %s22, 0
      %p122 = por %p120, %p121
      %p123 = scmp.le.s32.totalorder 1, %s16
      %p124 = scmp.lt.s32.totalorder %s16, 3
      %p125 = pnand %p123, %p124
      %p126 = pneg %p125
      // Predicated region
      $region9: #{tpu_custom_call.1} parent=5 // pred_check
        _
      $region10: #{tpu_custom_call.1} parent=5 // pred_check_branch
        %128 = sbr.rel (%p125) target = $region12
      $region11: #{tpu_custom_call.1} parent=5 // pred_region
        %s129 = ssub.s32 %s16, 1
        // Predicated region
        $region13: #{tpu_custom_call.1} parent=11 // pred_check
          %p130 = pneg %p63
        $region14: #{tpu_custom_call.1} parent=11 // pred_check_branch
          %132 = sbr.rel (%p130) target = $region16
        $region15: #{tpu_custom_call.1} parent=11 // pred_region
          _
        $region16: #{tpu_custom_call.1} parent=11 // pred_fallthru
          _
      $region12: #{tpu_custom_call.1} parent=5 // pred_fallthru
        _
      %p133 = scmp.lt.s32.totalorder %s16, 2
      // Predicated region
      $region17: #{tpu_custom_call.1} parent=5 // pred_check
        %p134 = pneg %p133
      $region18: #{tpu_custom_call.1} parent=5 // pred_check_branch
        %136 = sbr.rel (%p134) target = $region20
      $region19: #{tpu_custom_call.1} parent=5 // pred_region
        // Predicated region
        $region21: #{tpu_custom_call.1} parent=19 // pred_check
          %p137 = pneg %p36
        $region22: #{tpu_custom_call.1} parent=19 // pred_check_branch
          %139 = sbr.rel (%p137) target = $region24
        $region23: #{tpu_custom_call.1} parent=19 // pred_region
          %s140 = smul.u32 16, %s16
          %p141 = scmp.lt.s32.totalorder %s140, 31
          %s142 = scalar_select %p141, %s140, 31
          %s143 = smul.addr %s142, 8
          %s144 = scalar_lea.vmem %s0, %s143
          %s145 = smul.u32 16, %s16
        $region24: #{tpu_custom_call.1} parent=19 // pred_fallthru
          _
      $region20: #{tpu_custom_call.1} parent=5 // pred_fallthru
        _
      %p146 = scmp.le.s32.totalorder 1, %s16
      %p147 = scmp.lt.s32.totalorder %s16, 3
      %p148 = pnand %p146, %p147
      %p149 = pneg %p148
      // Predicated region
      $region25: #{tpu_custom_call.1} parent=5 // pred_check
        _
      $region26: #{tpu_custom_call.1} parent=5 // pred_check_branch
        %151 = sbr.rel (%p148) target = $region28
      $region27: #{tpu_custom_call.1} parent=5 // pred_region
        %s152 = ssub.s32 %s16, 1
        %s153 = smul.u32 16, %s21
        %p154 = scmp.lt.s32.totalorder %s153, 31
        %s155 = scalar_select %p154, %s153, 31
        %s156 = smul.addr %s155, 8
        %s157 = scalar_lea.vmem %s0, %s156
        %p158 = pneg %p42
        %p159 = pneg %p39
        %p160 = pneg %p63
        %p161 = pneg %p60
        %p162 = pneg %p89
        %p163 = pneg %p86
        %s164 = sand.u32 %s76, 1
        %s165 = scalar_lea.sflag [#allocation3], %s164
        %s166 = sand.u32 %s76, 1
        %s167 = smul.addr %s166, 4
        %s168 = scalar_lea.vmem [#allocation2], %s167
        %p169 = pneg %p115
        %p170 = pneg %p112
        %s171 = sand.u32 %s102, 1
        %s172 = scalar_lea.sflag [#allocation5], %s171
        %s173 = sand.u32 %s102, 1
        %s174 = smul.addr %s173, 4
        %s175 = scalar_lea.vmem [#allocation4], %s174
        %s176 = smul.u32 16, %s21
        %p177 = scmp.lt.s32.totalorder %s176, 31
        %s178 = scalar_select %p177, %s176, 31
        %s179 = smul.addr %s178, 8
        %s180 = scalar_lea.vmem %s0, %s179
        %s181 = smul.u32 16, %s21
        %v182 = vld [vmem:[%s1] sm:$0xf]
        %v183 = vld [vmem:[%s180] sm:$0xff]
        %v184 = vld [vmem:[%s180 + $0x8] sm:$0xff]
        %v185 = vld [vmem:[%s180 + $0x10] sm:$0xff]
        %v186 = vld [vmem:[%s180 + $0x18] sm:$0xff]
        %v187 = vld [vmem:[%s180 + $0x20] sm:$0xff]
        %v188 = vld [vmem:[%s180 + $0x28] sm:$0xff]
        %v189 = vld [vmem:[%s180 + $0x30] sm:$0xff]
        %v190 = vld [vmem:[%s180 + $0x38] sm:$0xff]
        %v191 = vld [vmem:[%s180 + $0x40] sm:$0xff]
        %v192 = vld [vmem:[%s180 + $0x48] sm:$0xff]
        %v193 = vld [vmem:[%s180 + $0x50] sm:$0xff]
        %v194 = vld [vmem:[%s180 + $0x58] sm:$0xff]
        %v195 = vld [vmem:[%s180 + $0x60] sm:$0xff]
        %v196 = vld [vmem:[%s180 + $0x68] sm:$0xff]
        %v197 = vld [vmem:[%s180 + $0x70] sm:$0xff]
        %v198 = vld [vmem:[%s180 + $0x78] sm:$0xff]
        %vm199 = vcmask 261120
        %v201 = vsel %vm199, %v182, 0
        %v204 = vsel %vm199, %v183, 0
        %v207 = vsel %vm199, %v184, 0
        %v210 = vsel %vm199, %v185, 0
        %v213 = vsel %vm199, %v186, 0
        %v216 = vsel %vm199, %v187, 0
        %v219 = vsel %vm199, %v188, 0
        %v222 = vsel %vm199, %v189, 0
        %v225 = vsel %vm199, %v190, 0
        %v228 = vsel %vm199, %v191, 0
        %v231 = vsel %vm199, %v192, 0
        %v234 = vsel %vm199, %v193, 0
        %v237 = vsel %vm199, %v194, 0
        %v240 = vsel %vm199, %v195, 0
        %v243 = vsel %vm199, %v196, 0
        %v246 = vsel %vm199, %v197, 0
        %v249 = vsel %vm199, %v198, 0
        %251 = vmatprep.subr.mxu0 0.0
        %252 = vmatpush1.xpose.msra.mxu0 %v204
        %253 = vmatprep.subr.mxu0 0.0
        %254 = vmatpush1.xpose.msra.mxu0 %v207
        %255 = vmatprep.subr.mxu0 0.0
        %256 = vmatpush1.xpose.msra.mxu0 %v210
        %257 = vmatprep.subr.mxu0 0.0
        %258 = vmatpush1.xpose.msra.mxu0 %v213
        %259 = vmatprep.subr.mxu0 0.0
        %260 = vmatpush1.xpose.msra.mxu0 %v216
        %261 = vmatprep.subr.mxu0 0.0
        %262 = vmatpush1.xpose.msra.mxu0 %v219
        %263 = vmatprep.subr.mxu0 0.0
        %264 = vmatpush1.xpose.msra.mxu0 %v222
        %265 = vmatprep.subr.mxu0 0.0
        %266 = vmatpush1.xpose.msra.mxu0 %v225
        %267 = vmatprep.subr.mxu0 0.0
        %268 = vmatpush1.xpose.msra.mxu0 %v228
        %269 = vmatprep.subr.mxu0 0.0
        %270 = vmatpush1.xpose.msra.mxu0 %v231
        %271 = vmatprep.subr.mxu0 0.0
        %272 = vmatpush1.xpose.msra.mxu0 %v234
        %273 = vmatprep.subr.mxu0 0.0
        %274 = vmatpush1.xpose.msra.mxu0 %v237
        %275 = vmatprep.subr.mxu0 0.0
        %276 = vmatpush1.xpose.msra.mxu0 %v240
        %277 = vmatprep.subr.mxu0 0.0
        %278 = vmatpush1.xpose.msra.mxu0 %v243
        %279 = vmatprep.subr.mxu0 0.0
        %280 = vmatpush1.xpose.msra.mxu0 %v246
        %281 = vmatprep.subr.mxu0 0.0
        %282 = vmatpush1.xpose.msra.mxu0 %v249
        %283 = vmatprep.subr.mxu0 0.0
        %284 = vmatpush1.xpose.msra.mxu0 0.0
        %285 = vmatprep.subr.mxu0 0.0
        %286 = vmatpush1.xpose.msra.mxu0 0.0
        %287 = vmatprep.subr.mxu0 0.0
        %288 = vmatpush1.xpose.msra.mxu0 0.0
        %289 = vmatprep.subr.mxu0 0.0
        %290 = vmatpush1.xpose.msra.mxu0 0.0
        %291 = vmatprep.subr.mxu0 0.0
        %292 = vmatpush1.xpose.msra.mxu0 0.0
        %293 = vmatprep.subr.mxu0 0.0
        %294 = vmatpush1.xpose.msra.mxu0 0.0
        %295 = vmatprep.subr.mxu0 0.0
        %296 = vmatpush1.xpose.msra.mxu0 0.0
        %297 = vmatprep.subr.mxu0 0.0
        %298 = vmatpush1.xpose.msra.mxu0 0.0
        %299 = vmatprep.subr.mxu0 0.0
        %300 = vmatpush1.xpose.msra.mxu0 0.0
        %301 = vmatprep.subr.mxu0 0.0
        %302 = vmatpush1.xpose.msra.mxu0 0.0
        %303 = vmatprep.subr.mxu0 0.0
        %304 = vmatpush1.xpose.msra.mxu0 0.0
        %305 = vmatprep.subr.mxu0 0.0
        %306 = vmatpush1.xpose.msra.mxu0 0.0
        %307 = vmatprep.subr.mxu0 0.0
        %308 = vmatpush1.xpose.msra.mxu0 0.0
        %309 = vmatprep.subr.mxu0 0.0
        %310 = vmatpush1.xpose.msra.mxu0 0.0
        %311 = vmatprep.subr.mxu0 0.0
        %312 = vmatpush1.xpose.msra.mxu0 0.0
        %313 = vmatprep.subr.mxu0 0.0
        %314 = vmatpush1.xpose.msra.mxu0 0.0
        %315 = vmatprep.mubr.f32.mxu0 0.0
        %316 = vmatmul.mubr.f32.gmra.mrb[0].mxu0 %v201
        %v317 = vpop.f32.mrb[0].mxu0
        %v318 = vadd.f32 0.0, %v317
        %v319 = vpop.f32.mrb[0].mxu0
        %320 = vdwg.mxu0
        %v321 = vlaneseq
        %v322 = vand.u32 %v321, 127
        %s323 = smul.u32 %s21, 128
        %v324 = vstv %s323
        %v325 = vadd.s32 %v324, %v322
        %vm326 = vcmp.lt.s32.totalorder %v325, 200
        %vm327 = vcmask 1043456
        %v328 = vsel %vm327, %v318, -inf
        %v329 = vrot.slane %v328, 4
        %v330 = vmax.f32 %v328, %v329
        %v331 = vrot.slane %v330, 2
        %v332 = vmax.f32 %v330, %v331
        %v333 = vrot.slane %v332, 1
        %v334 = vmax.f32 %v332, %v333
        %v335 = vsub.f32 %v318, %v334
        %v336 = vmul.f32 %v335, 1.442695
        %v337 = vpow.pop %v336
        %v338 = vsel %vm327, %v337, 0.0
        %v339 = vrot.slane %v338, 4
        %v340 = vadd.f32 %v338, %v339
        %v341 = vrot.slane %v340, 2
        %v342 = vadd.f32 %v340, %v341
        %v343 = vrot.slane %v342, 1
        %v344 = vadd.f32 %v342, %v343
        %v345 = vrcp.pop %v344
        %v346 = vmul.f32 %v337, %v345
        %v347 = vlaneseq
        %v348 = vshrl.u32 %v347, 7
        %v349 = vsel %vm327, %v346, -inf
        %v350 = vrot.slane %v349, 4
        %v351 = vmax.f32 %v349, %v350
        %v352 = vrot.slane %v351, 2
        %v353 = vmax.f32 %v351, %v352
        %v354 = vrot.slane %v353, 1
        %v355 = vmax.f32 %v353, %v354
        %vm356 = vcmp.eq.f32.partialorder %v346, %v355
        %v357 = vsel %vm356, %v348, 4
        %v358 = vsel %vm327, %v357, 2147483647
        %v359 = vrot.slane %v358, 4
        %vm360 = vcmp.lt.s32.totalorder %v358, %v359
        %v361 = vsel %vm360, %v358, %v359
        %v362 = vrot.slane %v361, 2
        %vm363 = vcmp.lt.s32.totalorder %v361, %v362
        %v364 = vsel %vm363, %v361, %v362
        %v365 = vrot.slane %v364, 1
        %vm366 = vcmp.lt.s32.totalorder %v364, %v365
        %v367 = vsel %vm366, %v364, %v365
        %vm368 = vcmp.eq.s32.totalorder %v348, %v367
        %v369 = vsel %vm368, -inf, %v346
        %v370 = vsel %vm327, %v369, -inf
        %v371 = vrot.slane %v370, 4
        %v372 = vmax.f32 %v370, %v371
        %v373 = vrot.slane %v372, 2
        %v374 = vmax.f32 %v372, %v373
        %v375 = vrot.slane %v374, 1
        %v376 = vmax.f32 %v374, %v375
        %vm377 = vcmp.eq.f32.partialorder %v369, %v376
        %v378 = vsel %vm377, %v348, 4
        %v379 = vsel %vm327, %v378, 2147483647
        %v380 = vrot.slane %v379, 4
        %vm381 = vcmp.lt.s32.totalorder %v379, %v380
        %v382 = vsel %vm381, %v379, %v380
        %v383 = vrot.slane %v382, 2
        %vm384 = vcmp.lt.s32.totalorder %v382, %v383
        %v385 = vsel %vm384, %v382, %v383
        %v386 = vrot.slane %v385, 1
        %vm387 = vcmp.lt.s32.totalorder %v385, %v386
        %v388 = vsel %vm387, %v385, %v386
        %vm389 = vcmp.eq.s32.totalorder %v348, %v388
        %vm390 = vmor %vm368, %vm389
        %v391 = vsel %vm326, 1, 0
        %vm392 = vcmp.eq.s32.totalorder %v391, 1
        %vm393 = vmand %vm390, %vm392
        %v394 = vsel %vm393, %v346, 0.0
        %395 = vst [vmem:[%s168] sm:$0xf] %v394
        %v396 = vsel %vm392, %v346, 0.0
        %v397 = vsel %vm327, %v396, 0.0
        %398 = vadd.xlane.f32.xlu0 %v397
        %v399 = vpop.xlane.xlu0 %398
        %v400 = vsel %vm393, 1.0, 0.0
        %v401 = vsel %vm327, %v400, 0.0
        %402 = vadd.xlane.f32.xlu0 %v401
        %v403 = vpop.xlane.xlu0 %402
        %vm404 = vcmp.ne.s32.totalorder %v367, 0
        %v405 = vsel %vm404, 1, 0
        %v406 = vcvt.s32.f32 %v405
        %vm407 = vcmp.ne.s32.totalorder %v388, 0
        %v408 = vsel %vm407, 1, 0
        %v409 = vcvt.s32.f32 %v408
        %v410 = vadd.f32 %v406, %v409
        %v411 = vsel %vm326, %v410, 0.0
        %vm412 = vcmask 1040384
        %v413 = vsel %vm412, %v411, 0.0
        %414 = vadd.xlane.f32.xlu0 %v413
        %v415 = vpop.xlane.xlu0 %414
        %v416 = vrot.slane %v415, 4
        %v417 = vadd.f32 %v415, %v416
        %v418 = vrot.slane %v417, 2
        %v419 = vadd.f32 %v417, %v418
        %v420 = vrot.slane %v419, 1
        %v421 = vadd.f32 %v419, %v420
        %s422 = vtos %v421
        %vm423 = vcmp.eq.s32.totalorder %v322, 0
        %vm424 = vcmp.eq.s32.totalorder %v322, 1
        %v425 = vsel %vm424, %v403, 0.0
        %v426 = vsel %vm423, %v399, %v425
        %vm427 = vcmp.eq.s32.totalorder %v322, 2
        %vm428 = vcmp.eq.s32.totalorder %v348, 0
        %vm429 = vmand %vm427, %vm428
        %v430 = vstv %s422
        %v431 = vsel %vm429, %v430, %v426
        %vm432 = vcmask 60416
        %433 = vst.msk [vmem:[%s175] sm:$0xf] %vm432, %v431
        %s434 = sand.u32 %s76, 1
        %s435 = scalar_lea.sflag [#allocation3], %s434
        %s436 = sand.u32 %s76, 1
        %s437 = smul.addr %s436, 4
        %s438 = scalar_lea.vmem [#allocation2], %s437
        %s439 = sand.u32 %s102, 1
        %s440 = scalar_lea.sflag [#allocation5], %s439
        %s441 = sand.u32 %s102, 1
        %s442 = smul.addr %s441, 4
        %s443 = scalar_lea.vmem [#allocation4], %s442
        // Predicated region
        $region29: #{tpu_custom_call.1} parent=27 // pred_check
          %p444 = pneg %p86
        $region30: #{tpu_custom_call.1} parent=27 // pred_check_branch
          %446 = sbr.rel (%p444) target = $region32
        $region31: #{tpu_custom_call.1} parent=27 // pred_region
          %s448 = ssub.s32 64, 64
          %449 = vsyncadd %s435, %s448
          %s450 = smul.addr %s21, 64
          %s451 = scalar_lea.hbm %s2, %s450
          %s453 = sshll.u32 %s438, 4
          %s454 = int_to_ptr.vmem [resolvable:$true] %s453
          %456 = dma.vmem_to_hbm [thread:$0]  %s454, 64, %s451, %s435
        $region32: #{tpu_custom_call.1} parent=27 // pred_fallthru
          _
        // Predicated region
        $region33: #{tpu_custom_call.1} parent=27 // pred_check
          %p457 = pneg %p112
        $region34: #{tpu_custom_call.1} parent=27 // pred_check_branch
          %459 = sbr.rel (%p457) target = $region36
        $region35: #{tpu_custom_call.1} parent=27 // pred_region
          %s461 = ssub.s32 64, 64
          %462 = vsyncadd %s440, %s461
          %s463 = smul.addr %s21, 64
          %s464 = scalar_lea.hbm %s3, %s463
          %s466 = sshll.u32 %s443, 4
          %s467 = int_to_ptr.vmem [resolvable:$true] %s466
          %469 = dma.vmem_to_hbm [thread:$0]  %s467, 64, %s464, %s440
        $region36: #{tpu_custom_call.1} parent=27 // pred_fallthru
          _
      $region28: #{tpu_custom_call.1} parent=5 // pred_fallthru
        _
      %p470 = scmp.le.s32.totalorder 2, %s16
      // Predicated region
      $region37: #{tpu_custom_call.1} parent=5 // pred_check
        %p471 = pneg %p470
      $region38: #{tpu_custom_call.1} parent=5 // pred_check_branch
        %473 = sbr.rel (%p471) target = $region40
      $region39: #{tpu_custom_call.1} parent=5 // pred_region
        %s474 = ssub.s32 %s16, 2
        // Predicated region
        $region41: #{tpu_custom_call.1} parent=39 // pred_check
          %p475 = pneg %p92
        $region42: #{tpu_custom_call.1} parent=39 // pred_check_branch
          %477 = sbr.rel (%p475) target = $region44
        $region43: #{tpu_custom_call.1} parent=39 // pred_region
          %s478 = sand.u32 %s77, 1
          %s479 = scalar_lea.sflag [#allocation3], %s478
          %s480 = sand.u32 %s77, 1
          %s481 = smul.addr %s480, 4
          %s482 = scalar_lea.vmem [#allocation2], %s481
          %483 = dma.done %s479, 64
        $region44: #{tpu_custom_call.1} parent=39 // pred_fallthru
          _
        // Predicated region
        $region45: #{tpu_custom_call.1} parent=39 // pred_check
          %p484 = pneg %p118
        $region46: #{tpu_custom_call.1} parent=39 // pred_check_branch
          %486 = sbr.rel (%p484) target = $region48
        $region47: #{tpu_custom_call.1} parent=39 // pred_region
          %s487 = sand.u32 %s103, 1
          %s488 = scalar_lea.sflag [#allocation5], %s487
          %s489 = sand.u32 %s103, 1
          %s490 = smul.addr %s489, 4
          %s491 = scalar_lea.vmem [#allocation4], %s490
          %492 = dma.done %s488, 64
        $region48: #{tpu_custom_call.1} parent=39 // pred_fallthru
          _
      $region40: #{tpu_custom_call.1} parent=5 // pred_fallthru
        _
    $region6: #{tpu_custom_call.1} parent=1 // loop_footer
      %s20 = sadd.s32 1, %s16
    $region7: #{tpu_custom_call.1} parent=1 // loop_footer_branch
      %15 = sbr.rel target = $region3
    $region8: #{tpu_custom_call.1} parent=1 // loop_exit
      _
    %493 = vsyncpa [#allocation3], 1
    %s494 = scalar_lea.sflag [#allocation3], 1
    %495 = vsyncpa %s494, 1
    %496 = vsyncpa [#allocation5], 1
    %s497 = scalar_lea.sflag [#allocation5], 1
    %498 = vsyncpa %s497, 1

</llo_original>
